<compile_context>
chip_gen: v7x
topology: tpu7x:2x2x1
jax: 0.10.0
libtpu: 0.0.40
codegen_flags: <defaults>
</compile_context>

<pallas_src>
import functools

import jax
import jax.numpy as jnp
from jax.experimental import pallas as pl
from jax.experimental.pallas import tpu as pltpu


def _round_up(n, m):
    return ((n + m - 1) // m) * m


def _resident_spec(block_shape, index_map):
    """BlockSpec for a grid-invariant operand: single-buffer it (constant
    index_map => double-buffering only wastes VMEM)."""
    try:
        return pl.BlockSpec(block_shape, index_map, pipeline_mode=pl.Buffered(1))
    except (TypeError, AttributeError):
        return pl.BlockSpec(block_shape, index_map)


def _kan_kernel(x_ref, wpsi_ref, bpsi_ref, wphi_ref, bphi_ref, out_ref, *,
                num_branches, h_pad):
    """One batch tile per grid step; weights/biases are VMEM-resident."""
    # All O psi branches in one lane-dense matmul: (tb, I) @ (I, O*Hp) -> f32.
    h = jnp.dot(x_ref[...], wpsi_ref[...], preferred_element_type=jnp.float32)
    h = jnp.maximum(h + bpsi_ref[...], 0.0)                      # ReLU (VPU, f32)

    # Branch sum on the VPU: Hp is a multiple of 128, so these are pure
    # lane-aligned slice adds (no XLU relayout, no extra MXU work).
    h_sum = h[:, 0:h_pad]
    for j in range(1, num_branches):
        h_sum = h_sum + h[:, j * h_pad:(j + 1) * h_pad]

    # Small phi head, kept in f32 (accuracy is cheap here): (tb, Hp) @ (Hp, O_pad).
    logits = jnp.dot(h_sum, wphi_ref[...], preferred_element_type=jnp.float32)
    # bphi pad columns are pre-baked to -1e30, so padded classes vanish in the
    # softmax without any per-tile iota/compare/select.
    logits = logits + bphi_ref[...]

    m = jnp.max(logits, axis=-1, keepdims=True)
    e = jnp.exp(logits - m)
    denom = jnp.sum(e, axis=-1, keepdims=True)
    out_ref[...] = (e * pl.reciprocal(denom, approx=False)).astype(out_ref.dtype)


def prepare_kan_params(w_psi, b_psi, w_phi, b_phi, *, compute_dtype=jnp.bfloat16):
    """One-time weight packing (keep this OUT of the per-call forward path).

    w_psi: (O, H, I)  PyTorch Linear weights per branch (out, in)
    b_psi: (O, H);  w_phi: (O, H);  b_phi: (O,)
    """
    O, H, I = w_psi.shape
    H_pad = _round_up(H, 128)      # lane-aligned per-branch blocks
    O_pad = _round_up(O, 128)      # lane-dense logits / output stores
    OHp = O * H_pad

    # [Wpsi_0^T | Wpsi_1^T | ...], each branch zero-padded to Hp columns.
    wpsi_t = jnp.transpose(w_psi, (2, 0, 1))                     # (I, O, H)
    wpsi_t = jnp.pad(wpsi_t, ((0, 0), (0, 0), (0, H_pad - H)))   # (I, O, Hp)
    wpsi_wide = wpsi_t.reshape(I, OHp).astype(compute_dtype)

    bpsi_p = jnp.pad(b_psi, ((0, 0), (0, H_pad - H)))            # (O, Hp)
    bpsi_wide = bpsi_p.reshape(1, OHp).astype(jnp.float32)

    # Wphi^T with zero-padded rows/cols (kept in f32: it is tiny).
    wphi_t = jnp.transpose(w_phi, (1, 0))                        # (H, O)
    wphi_pad = jnp.pad(wphi_t, ((0, H_pad - H), (0, O_pad - O))).astype(jnp.float32)

    # phi bias with -1e30 in the class-padding columns (pre-baked softmax mask;
    # wphi pad columns are zero, so padded logits become exactly -1e30).
    bphi_pad = jnp.full((1, O_pad), -1e30, dtype=jnp.float32)
    bphi_pad = bphi_pad.at[0, :O].set(b_phi.astype(jnp.float32))

    return wpsi_wide, bpsi_wide, wphi_pad, bphi_pad


@functools.partial(jax.jit, static_argnames=("output_dim",))
def kan_forward(x, wpsi_wide, bpsi_wide, wphi_pad, bphi_pad, *, output_dim):
    """x: any shape (B, ...); flattened to (B, input_dim) like x.view(B, -1)."""
    B = x.shape[0]
    I, OHp = wpsi_wide.shape
    H_pad, O_pad = wphi_pad.shape
    num_branches = OHp // H_pad
    compute_dtype = wpsi_wide.dtype
    w_bytes = jnp.dtype(compute_dtype).itemsize

    x2d = x.reshape(B, -1).astype(compute_dtype)                 # (B, I)

    # bf16 vregs pack 16 sublanes -> pad batch to a multiple of 16.
    B_pad = _round_up(B, 16)
    if B_pad <= 16:
        tb = B_pad
    else:
        # >= 2 batch tiles so both v7x TensorCores get work; cap at 512 so big
        # batches still amortize the ~0.35 us per-grid-step overhead.
        tb = min(512, _round_up(-(-B_pad // 2), 16))
    B_full = _round_up(B_pad, tb)
    if B_full != B:
        x2d = jnp.pad(x2d, ((0, B_full - B), (0, 0)))
    grid = (B_full // tb,)

    # VMEM budget: double-buffered x/out tiles + single-buffered resident
    # weights/biases + in-flight f32 intermediates.
    need = (2 * tb * I * w_bytes + 2 * tb * O_pad * 4
            + I * OHp * w_bytes + OHp * 4
            + H_pad * O_pad * 4 + O_pad * 4
            + tb * (OHp + H_pad + 2 * O_pad) * 4)
    try:
        vmem_cap = pltpu.get_tpu_info().vmem_capacity_bytes      # 128 MiB v5e/v6e, 64 MiB v7x
    except Exception:
        vmem_cap = 64 << 20
    vmem_limit = None
    if need > (16 << 20):
        vmem_limit = min(max(2 * need, 32 << 20), vmem_cap - (4 << 20))
    # TODO(synk): for very large I*O*H (resident psi weights approaching the
    # v7x 64 MiB VMEM cap) add a weight-streaming path (tile OHp as an
    # 'arbitrary' grid axis with a VMEM accumulator) instead of keeping all
    # weights resident.

    cost = pl.CostEstimate(
        flops=2 * B_full * I * OHp + 2 * B_full * H_pad * O_pad,
        transcendentals=B_full * O_pad,
        bytes_accessed=(B_full * I * w_bytes
                        + I * OHp * w_bytes + OHp * 4
                        + H_pad * O_pad * 4 + O_pad * 4
                        + B_full * O_pad * 4),
    )

    out_padded = pl.pallas_call(
        functools.partial(_kan_kernel, num_branches=num_branches, h_pad=H_pad),
        out_shape=jax.ShapeDtypeStruct((B_full, O_pad), jnp.float32),
        grid=grid,
        in_specs=[
            pl.BlockSpec((tb, I), lambda b: (b, 0)),             # x batch tile
            _resident_spec((I, OHp), lambda b: (0, 0)),          # packed psi weights
            _resident_spec((1, OHp), lambda b: (0, 0)),          # packed psi bias
            _resident_spec((H_pad, O_pad), lambda b: (0, 0)),    # padded phi weights
            _resident_spec((1, O_pad), lambda b: (0, 0)),        # padded phi bias (+mask)
        ],
        out_specs=pl.BlockSpec((tb, O_pad), lambda b: (b, 0)),
        compiler_params=pltpu.CompilerParams(
            dimension_semantics=("parallel",),                   # batch tiles -> both TCs
            vmem_limit_bytes=vmem_limit,
        ),
        cost_estimate=cost,
    )(x2d, wpsi_wide, bpsi_wide, wphi_pad, bphi_pad)

    return out_padded[:B, :output_dim]


def _reference(x, w_psi, b_psi, w_phi, b_phi):
    B = x.shape[0]
    x2d = x.reshape(B, -1)
    h = sum(jnp.maximum(x2d @ w_psi[j].T + b_psi[j], 0.0)
            for j in range(w_psi.shape[0]))
    logits = h @ w_phi.T + b_phi
    return jax.nn.softmax(logits, axis=1)


if __name__ == "__main__":
    # Small shapes consistent with the module's forward:
    # x: (batch=2, 4, 8) -> flattened input_dim=32, hidden_dim=32, output_dim=8
    B, input_dim, hidden_dim, output_dim = 2, 32, 32, 8

    key = jax.random.PRNGKey(0)
    kx, k1, k2, k3, k4 = jax.random.split(key, 5)

    x = jax.random.normal(kx, (B, 4, 8), dtype=jnp.float32)

    # Deterministic synthetic parameters (PyTorch Linear shapes: W is (out, in)).
    w_psi = 0.1 * jax.random.normal(k1, (output_dim, hidden_dim, input_dim),
                                    dtype=jnp.float32)
    b_psi = 0.1 * jax.random.normal(k2, (output_dim, hidden_dim), dtype=jnp.float32)
    w_phi = 0.1 * jax.random.normal(k3, (output_dim, hidden_dim), dtype=jnp.float32)
    b_phi = 0.1 * jax.random.normal(k4, (output_dim,), dtype=jnp.float32)

    # One-time packing (transpose / pad / bf16 cast), then run.
    params = prepare_kan_params(w_psi, b_psi, w_phi, b_phi)
    out = kan_forward(x, *params, output_dim=output_dim)
    out = jax.block_until_ready(out)

    ref = _reference(x, w_psi, b_psi, w_phi, b_phi)
    assert out.shape == (B, output_dim)
    # bf16 psi matmul (f32 accumulation) -> loosened tolerance vs f32 reference.
    assert jnp.allclose(out, ref, atol=2e-2, rtol=2e-2), (
        f"mismatch vs reference, max abs err = {jnp.max(jnp.abs(out - ref))}")
    assert jnp.allclose(jnp.sum(out, axis=1), 1.0, atol=1e-3)

    print("KERNEL_OK")
</pallas_src>

<mosaic_0001>
module attributes {stable_mosaic.version = 11 : i64} {
  func.func @_kan_kernel(%arg0: i32, %arg1: memref<16x32xbf16, #tpu.memory_space<vmem>>, %arg2: memref<32x1024xbf16, #tpu.memory_space<vmem>>, %arg3: memref<1x1024xf32, #tpu.memory_space<vmem>>, %arg4: memref<128x128xf32, #tpu.memory_space<vmem>>, %arg5: memref<1x128xf32, #tpu.memory_space<vmem>>, %arg6: memref<16x128xf32, #tpu.memory_space<vmem>>) attributes {dimension_semantics = [#tpu.dimension_semantics<parallel>], iteration_bounds = array<i64: 1>, scalar_prefetch = 0 : i64, scratch_operands = 0 : i64, tpu.core_type = #tpu.core_type<tc>, window_params = [{transform_indices = @transform_0, window_bounds = array<i64: 16, 32>}, {pipeline_mode = #tpu.pipeline_mode<synchronous>, transform_indices = @transform_1, window_bounds = array<i64: 32, 1024>}, {pipeline_mode = #tpu.pipeline_mode<synchronous>, transform_indices = @transform_2, window_bounds = array<i64: 1, 1024>}, {pipeline_mode = #tpu.pipeline_mode<synchronous>, transform_indices = @transform_3, window_bounds = array<i64: 128, 128>}, {pipeline_mode = #tpu.pipeline_mode<synchronous>, transform_indices = @transform_4, window_bounds = array<i64: 1, 128>}, {transform_indices = @transform_5, window_bounds = array<i64: 16, 128>}]} {
    %c0 = arith.constant 0 : index
    %c0_0 = arith.constant 0 : index
    %0 = vector.load %arg1[%c0, %c0_0] : memref<16x32xbf16, #tpu.memory_space<vmem>>, vector<16x32xbf16>
    %c0_1 = arith.constant 0 : index
    %c0_2 = arith.constant 0 : index
    %1 = vector.load %arg2[%c0_1, %c0_2] : memref<32x1024xbf16, #tpu.memory_space<vmem>>, vector<32x1024xbf16>
    %cst = arith.constant dense<0.000000e+00> : vector<16x1024xf32>
    %2 = tpu.matmul %0, %1, %cst {dimension_numbers = #tpu.dot_dimension_numbers<[1], [0], [0], [1], [0, 0, 1, 1], [], []>} : vector<16x32xbf16>, vector<32x1024xbf16>, vector<16x1024xf32> -> vector<16x1024xf32>
    %c0_3 = arith.constant 0 : index
    %c0_4 = arith.constant 0 : index
    %3 = vector.load %arg3[%c0_3, %c0_4] : memref<1x1024xf32, #tpu.memory_space<vmem>>, vector<1x1024xf32>
    %4 = vector.broadcast %3 : vector<1x1024xf32> to vector<16x1024xf32>
    %5 = arith.addf %2, %4 : vector<16x1024xf32>
    %cst_5 = arith.constant 0.000000e+00 : f32
    %6 = vector.broadcast %cst_5 : f32 to vector<16x1024xf32>
    %7 = arith.maximumf %5, %6 : vector<16x1024xf32>
    %8 = vector.extract_strided_slice %7 {offsets = [0, 0], sizes = [16, 128], strides = [1, 1]} : vector<16x1024xf32> to vector<16x128xf32>
    %9 = vector.extract_strided_slice %7 {offsets = [0, 128], sizes = [16, 128], strides = [1, 1]} : vector<16x1024xf32> to vector<16x128xf32>
    %10 = arith.addf %8, %9 : vector<16x128xf32>
    %11 = vector.extract_strided_slice %7 {offsets = [0, 256], sizes = [16, 128], strides = [1, 1]} : vector<16x1024xf32> to vector<16x128xf32>
    %12 = arith.addf %10, %11 : vector<16x128xf32>
    %13 = vector.extract_strided_slice %7 {offsets = [0, 384], sizes = [16, 128], strides = [1, 1]} : vector<16x1024xf32> to vector<16x128xf32>
    %14 = arith.addf %12, %13 : vector<16x128xf32>
    %15 = vector.extract_strided_slice %7 {offsets = [0, 512], sizes = [16, 128], strides = [1, 1]} : vector<16x1024xf32> to vector<16x128xf32>
    %16 = arith.addf %14, %15 : vector<16x128xf32>
    %17 = vector.extract_strided_slice %7 {offsets = [0, 640], sizes = [16, 128], strides = [1, 1]} : vector<16x1024xf32> to vector<16x128xf32>
    %18 = arith.addf %16, %17 : vector<16x128xf32>
    %19 = vector.extract_strided_slice %7 {offsets = [0, 768], sizes = [16, 128], strides = [1, 1]} : vector<16x1024xf32> to vector<16x128xf32>
    %20 = arith.addf %18, %19 : vector<16x128xf32>
    %21 = vector.extract_strided_slice %7 {offsets = [0, 896], sizes = [16, 128], strides = [1, 1]} : vector<16x1024xf32> to vector<16x128xf32>
    %22 = arith.addf %20, %21 : vector<16x128xf32>
    %c0_6 = arith.constant 0 : index
    %c0_7 = arith.constant 0 : index
    %23 = vector.load %arg4[%c0_6, %c0_7] : memref<128x128xf32, #tpu.memory_space<vmem>>, vector<128x128xf32>
    %cst_8 = arith.constant dense<0.000000e+00> : vector<16x128xf32>
    %24 = tpu.matmul %22, %23, %cst_8 {dimension_numbers = #tpu.dot_dimension_numbers<[1], [0], [0], [1], [0, 0, 1, 1], [], []>} : vector<16x128xf32>, vector<128x128xf32>, vector<16x128xf32> -> vector<16x128xf32>
    %c0_9 = arith.constant 0 : index
    %c0_10 = arith.constant 0 : index
    %25 = vector.load %arg5[%c0_9, %c0_10] : memref<1x128xf32, #tpu.memory_space<vmem>>, vector<1x128xf32>
    %26 = vector.broadcast %25 : vector<1x128xf32> to vector<16x128xf32>
    %27 = arith.addf %24, %26 : vector<16x128xf32>
    %cst_11 = arith.constant dense<0xFF800000> : vector<16xf32>
    %28 = vector.multi_reduction <maximumf>, %27, %cst_11 [1] : vector<16x128xf32> to vector<16xf32>
    %29 = vector.shape_cast %28 : vector<16xf32> to vector<16x1xf32>
    %30 = vector.broadcast %29 : vector<16x1xf32> to vector<16x128xf32>
    %31 = arith.subf %27, %30 : vector<16x128xf32>
    %32 = math.exp %31 : vector<16x128xf32>
    %cst_12 = arith.constant dense<0.000000e+00> : vector<16xf32>
    %33 = vector.multi_reduction <add>, %32, %cst_12 [1] : vector<16x128xf32> to vector<16xf32>
    %34 = vector.shape_cast %33 : vector<16xf32> to vector<16x1xf32>
    %35 = tpu.reciprocal %34 : vector<16x1xf32> -> vector<16x1xf32>
    %36 = vector.broadcast %35 : vector<16x1xf32> to vector<16x128xf32>
    %37 = arith.mulf %32, %36 : vector<16x128xf32>
    %c0_13 = arith.constant 0 : index
    %c0_14 = arith.constant 0 : index
    %38 = vector.load %arg6[%c0_13, %c0_14] : memref<16x128xf32, #tpu.memory_space<vmem>>, vector<16x128xf32>
    tpu.vector_store %arg6[%c0_13, %c0_14], %37 {strides = array<i32>} : memref<16x128xf32, #tpu.memory_space<vmem>>, vector<16x128xf32>,
    return
  }
  func.func @transform_0(%arg0: i32) -> (i32, i32) {
    %c0_i32 = arith.constant 0 : i32
    %c0_i32_0 = arith.constant 0 : i32
    return %arg0, %c0_i32 : i32, i32
  }
  func.func @transform_1(%arg0: i32) -> (i32, i32) {
    %c0_i32 = arith.constant 0 : i32
    %c0_i32_0 = arith.constant 0 : i32
    %c0_i32_1 = arith.constant 0 : i32
    return %c0_i32, %c0_i32_0 : i32, i32
  }
  func.func @transform_2(%arg0: i32) -> (i32, i32) {
    %c0_i32 = arith.constant 0 : i32
    %c0_i32_0 = arith.constant 0 : i32
    %c0_i32_1 = arith.constant 0 : i32
    return %c0_i32, %c0_i32_0 : i32, i32
  }
  func.func @transform_3(%arg0: i32) -> (i32, i32) {
    %c0_i32 = arith.constant 0 : i32
    %c0_i32_0 = arith.constant 0 : i32
    %c0_i32_1 = arith.constant 0 : i32
    return %c0_i32, %c0_i32_0 : i32, i32
  }
  func.func @transform_4(%arg0: i32) -> (i32, i32) {
    %c0_i32 = arith.constant 0 : i32
    %c0_i32_0 = arith.constant 0 : i32
    %c0_i32_1 = arith.constant 0 : i32
    return %c0_i32, %c0_i32_0 : i32, i32
  }
  func.func @transform_5(%arg0: i32) -> (i32, i32) {
    %c0_i32 = arith.constant 0 : i32
    %c0_i32_0 = arith.constant 0 : i32
    return %arg0, %c0_i32 : i32, i32
  }
}

</mosaic_0001>

<llo_original>
// kernel: kan_forward.1
$region0: #{kan_forward.1}
  #allocation0 [shape = 'u32[]', space=smem, size = 0x4, offset = 0x4, fixed_abs, tag = 'smem constant byte address 0x4 - core index']
  #allocation1 [shape = 'u32[144,128]{1,0:T(1,128)}', space=vmem, size = 0x12000, scoped, tag = 'internal scratch']
  %s0 = inlined_call_operand.vmem [shape: bf16[16,32], index: 0, kind: input, shape index: {}]
  %s1 = inlined_call_operand.hbm [shape: bf16[32,1024], index: 1, kind: input, shape index: {}]
  %s2 = inlined_call_operand.vmem [shape: f32[1,1024], index: 2, kind: input, shape index: {}]
  %s3 = inlined_call_operand.hbm [shape: f32[128,128], index: 3, kind: input, shape index: {}]
  %s4 = inlined_call_operand.vmem [shape: f32[1,128], index: 4, kind: input, shape index: {}]
  %s5 = inlined_call_operand.vmem [shape: f32[16,128], index: 5, kind: output, shape index: {}]
  %s6 = sld [smem:[#allocation0]]
  $region38: #{kan_forward.1} parent=0
    _
  %s8 = ssub.s32 1, %s6
  %s9 = scalar_select 0, %s8, %s6
  $region1: #{kan_forward.1} parent=0
    #allocation2 [shape = 'u8[65536]{0}', space=vmem, size = 0x10000, scoped, tag = 'input window, operand 1, single buffered']
    #allocation3 [shape = 's32[1]{0}', space=sflag, size = 0x4, scoped, tag = 'scoped memory for kan_forward.1']
    #allocation4 [shape = 'u8[65536]{0}', space=vmem, size = 0x10000, scoped, tag = 'input window, operand 3, single buffered']
    #allocation5 [shape = 's32[1]{0}', space=sflag, size = 0x4, scoped, tag = 'scoped memory for kan_forward.1']
    %10 = vsyncpa [#allocation3], 0
    %11 = vsyncpa [#allocation5], 0
    // Predicated region
    $region2: #{kan_forward.1} parent=1 // pred_check
      _
    $region3: #{kan_forward.1} parent=1 // pred_check_branch
      %13 = sbr.rel (0) target = $region5
    $region4: #{kan_forward.1} parent=1 // pred_region
      _
    $region5: #{kan_forward.1} parent=1 // pred_fallthru
      _
    // Predicated region
    $region6: #{kan_forward.1} parent=1 // pred_check
      _
    $region7: #{kan_forward.1} parent=1 // pred_check_branch
      %15 = sbr.rel (0) target = $region9
    $region8: #{kan_forward.1} parent=1 // pred_region
      %s17 = ssub.s32 2048, 2048
      %18 = vsyncadd [#allocation3], %s17
      %s19 = sshll.u32 [#allocation2], 4
      %s20 = int_to_ptr.vmem [resolvable:$true] %s19
      %25 = dma.hbm_to_vmem [thread:$0]  %s1, 2048, %s20, [#allocation3], 512, 512, 32
    $region9: #{kan_forward.1} parent=1 // pred_fallthru
      _
    // Predicated region
    $region10: #{kan_forward.1} parent=1 // pred_check
      _
    $region11: #{kan_forward.1} parent=1 // pred_check_branch
      %27 = sbr.rel (0) target = $region13
    $region12: #{kan_forward.1} parent=1 // pred_region
      _
    $region13: #{kan_forward.1} parent=1 // pred_fallthru
      _
    // Predicated region
    $region14: #{kan_forward.1} parent=1 // pred_check
      _
    $region15: #{kan_forward.1} parent=1 // pred_check_branch
      %29 = sbr.rel (0) target = $region17
    $region16: #{kan_forward.1} parent=1 // pred_region
      %s31 = ssub.s32 2048, 2048
      %32 = vsyncadd [#allocation5], %s31
      %s33 = sshll.u32 [#allocation4], 4
      %s34 = int_to_ptr.vmem [resolvable:$true] %s33
      %39 = dma.hbm_to_vmem [thread:$0]  %s3, 2048, %s34, [#allocation5], 128, 128, 8
    $region17: #{kan_forward.1} parent=1 // pred_fallthru
      _
    // Predicated region
    $region18: #{kan_forward.1} parent=1 // pred_check
      _
    $region19: #{kan_forward.1} parent=1 // pred_check_branch
      %41 = sbr.rel (0) target = $region21
    $region20: #{kan_forward.1} parent=1 // pred_region
      _
    $region21: #{kan_forward.1} parent=1 // pred_fallthru
      _
    // Predicated region
    $region22: #{kan_forward.1} parent=1 // pred_check
      _
    $region23: #{kan_forward.1} parent=1 // pred_check_branch
      %43 = sbr.rel (0) target = $region25
    $region24: #{kan_forward.1} parent=1 // pred_region
      %44 = dma.done [#allocation3], 2048
    $region25: #{kan_forward.1} parent=1 // pred_fallthru
      _
    // Predicated region
    $region26: #{kan_forward.1} parent=1 // pred_check
      _
    $region27: #{kan_forward.1} parent=1 // pred_check_branch
      %46 = sbr.rel (0) target = $region29
    $region28: #{kan_forward.1} parent=1 // pred_region
      %47 = dma.done [#allocation5], 2048
    $region29: #{kan_forward.1} parent=1 // pred_fallthru
      _
    %v49 = vld [vmem:[%s0] sm:$0xf]
    %v50 = vld [vmem:[%s0 + $0x4] sm:$0xf]
    %v51 = vld [vmem:[#allocation2] sm:$0xff]
    %v52 = vld [vmem:[#allocation2 + $0x8] sm:$0xff]
    %v53 = vld [vmem:[#allocation2 + $0x10] sm:$0xff]
    %v54 = vld [vmem:[#allocation2 + $0x18] sm:$0xff]
    %v55 = vld [vmem:[#allocation2 + $0x20] sm:$0xff]
    %v56 = vld [vmem:[#allocation2 + $0x28] sm:$0xff]
    %v57 = vld [vmem:[#allocation2 + $0x30] sm:$0xff]
    %v58 = vld [vmem:[#allocation2 + $0x38] sm:$0xff]
    %v59 = vld [vmem:[#allocation2 + $0x40] sm:$0xff]
    %v60 = vld [vmem:[#allocation2 + $0x48] sm:$0xff]
    %v61 = vld [vmem:[#allocation2 + $0x50] sm:$0xff]
    %v62 = vld [vmem:[#allocation2 + $0x58] sm:$0xff]
    %v63 = vld [vmem:[#allocation2 + $0x60] sm:$0xff]
    %v64 = vld [vmem:[#allocation2 + $0x68] sm:$0xff]
    %v65 = vld [vmem:[#allocation2 + $0x70] sm:$0xff]
    %v66 = vld [vmem:[#allocation2 + $0x78] sm:$0xff]
    %v67 = vld [vmem:[%s2] sm:$0xff]
    %v69 = vlaneseq
    %v70 = vshrl.u32 %v69, 7
    %v71 = vsub.s32 0, %v70
    %v72 = vrot.slane %v67, %v71
    %v73 = vlaneseq
    %v74 = vshrl.u32 %v73, 7
    %v75 = vsub.s32 1, %v74
    %v76 = vrot.slane %v67, %v75
    %v77 = vlaneseq
    %v78 = vshrl.u32 %v77, 7
    %v79 = vsub.s32 2, %v78
    %v80 = vrot.slane %v67, %v79
    %v81 = vlaneseq
    %v82 = vshrl.u32 %v81, 7
    %v83 = vsub.s32 3, %v82
    %v84 = vrot.slane %v67, %v83
    %v85 = vlaneseq
    %v86 = vshrl.u32 %v85, 7
    %v87 = vsub.s32 4, %v86
    %v88 = vrot.slane %v67, %v87
    %v89 = vlaneseq
    %v90 = vshrl.u32 %v89, 7
    %v91 = vsub.s32 5, %v90
    %v92 = vrot.slane %v67, %v91
    %v93 = vlaneseq
    %v94 = vshrl.u32 %v93, 7
    %v95 = vsub.s32 6, %v94
    %v96 = vrot.slane %v67, %v95
    %v97 = vlaneseq
    %v98 = vshrl.u32 %v97, 7
    %v99 = vsub.s32 7, %v98
    %v100 = vrot.slane %v67, %v99
    %v111 = vunpack.c.l.b16 %v49
    %v112 = vunpack.c.l.b16 %v50
    %v113 = vpack.c.b16 %v112, %v111
    %v130 = vunpack.c.l.b16 %v51
    %v131 = vunpack.c.h.b16 %v51
    %v132 = vunpack.c.l.b16 %v52
    %v133 = vunpack.c.h.b16 %v52
    %v134 = vunpack.c.l.b16 %v53
    %v135 = vunpack.c.h.b16 %v53
    %v136 = vunpack.c.l.b16 %v54
    %v137 = vunpack.c.h.b16 %v54
    %v138 = vunpack.c.l.b16 %v55
    %v139 = vunpack.c.h.b16 %v55
    %v140 = vunpack.c.l.b16 %v56
    %v141 = vunpack.c.h.b16 %v56
    %v142 = vunpack.c.l.b16 %v57
    %v143 = vunpack.c.h.b16 %v57
    %v144 = vunpack.c.l.b16 %v58
    %v145 = vunpack.c.h.b16 %v58
    %v146 = vunpack.c.l.b16 %v59
    %v147 = vunpack.c.h.b16 %v59
    %v148 = vunpack.c.l.b16 %v60
    %v149 = vunpack.c.h.b16 %v60
    %v150 = vunpack.c.l.b16 %v61
    %v151 = vunpack.c.h.b16 %v61
    %v152 = vunpack.c.l.b16 %v62
    %v153 = vunpack.c.h.b16 %v62
    %v154 = vunpack.c.l.b16 %v63
    %v155 = vunpack.c.h.b16 %v63
    %v156 = vunpack.c.l.b16 %v64
    %v157 = vunpack.c.h.b16 %v64
    %v158 = vunpack.c.l.b16 %v65
    %v159 = vunpack.c.h.b16 %v65
    %v160 = vunpack.c.l.b16 %v66
    %v161 = vunpack.c.h.b16 %v66
    %v162 = vpack.c.b16 %v138, %v130
    %v163 = vpack.c.b16 %v139, %v131
    %v164 = vpack.c.b16 %v140, %v132
    %v165 = vpack.c.b16 %v141, %v133
    %v166 = vpack.c.b16 %v142, %v134
    %v167 = vpack.c.b16 %v143, %v135
    %v168 = vpack.c.b16 %v144, %v136
    %v169 = vpack.c.b16 %v145, %v137
    %v170 = vpack.c.b16 %v154, %v146
    %v171 = vpack.c.b16 %v155, %v147
    %v172 = vpack.c.b16 %v156, %v148
    %v173 = vpack.c.b16 %v157, %v149
    %v174 = vpack.c.b16 %v158, %v150
    %v175 = vpack.c.b16 %v159, %v151
    %v176 = vpack.c.b16 %v160, %v152
    %v177 = vpack.c.b16 %v161, %v153
    %vm194 = vcmask 261120
    %v196 = vsel %vm194, %v113, 0
    %198 = vmatprep.subr.bf16.mxu0 %v163
    %199 = vmatpush1.bf16.msra.mxu0 %v162
    %200 = vmatprep.subr.bf16.mxu0 %v171
    %201 = vmatpush1.bf16.msra.mxu0 %v170
    %202 = vmatprep.subr.bf16.mxu0 0
    %203 = vmatpush1.bf16.msra.mxu0 0
    %204 = vmatprep.subr.bf16.mxu0 0
    %205 = vmatpush1.bf16.msra.mxu0 0
    %206 = vmatprep.subr.bf16.mxu0 0
    %207 = vmatpush1.bf16.msra.mxu0 0
    %208 = vmatprep.subr.bf16.mxu0 0
    %209 = vmatpush1.bf16.msra.mxu0 0
    %210 = vmatprep.subr.bf16.mxu0 0
    %211 = vmatpush1.bf16.msra.mxu0 0
    %212 = vmatprep.subr.bf16.mxu0 0
    %213 = vmatpush1.bf16.msra.mxu0 0
    %214 = vmatprep.subr.bf16.mxu0 0
    %215 = vmatpush1.bf16.msra.mxu0 0
    %216 = vmatprep.subr.bf16.mxu0 0
    %217 = vmatpush1.bf16.msra.mxu0 0
    %218 = vmatprep.subr.bf16.mxu0 0
    %219 = vmatpush1.bf16.msra.mxu0 0
    %220 = vmatprep.subr.bf16.mxu0 0
    %221 = vmatpush1.bf16.msra.mxu0 0
    %222 = vmatprep.subr.bf16.mxu0 0
    %223 = vmatpush1.bf16.msra.mxu0 0
    %224 = vmatprep.subr.bf16.mxu0 0
    %225 = vmatpush1.bf16.msra.mxu0 0
    %226 = vmatprep.subr.bf16.mxu0 0
    %227 = vmatpush1.bf16.msra.mxu0 0
    %228 = vmatprep.subr.bf16.mxu0 0
    %229 = vmatpush1.bf16.msra.mxu0 0
    %230 = vmatprep.mubr.bf16.mxu0 0
    %231 = vmatmul.mubr.bf16.gmra.mrb[0].mxu0 %v196
    %v232 = vpop.f32.mrb[0].mxu0
    %v233 = vadd.f32 %v72, %v232
    %v234 = vpop.f32.mrb[0].mxu0
    %v235 = vadd.f32 %v76, %v234
    %v236 = vpop.f32.mrb[0].mxu0
    %v237 = vadd.f32 %v72, %v236
    %v238 = vpop.f32.mrb[0].mxu0
    %v239 = vadd.f32 %v76, %v238
    %240 = vdwg.mxu0
    %241 = vmatprep.subr.bf16.mxu0 %v165
    %242 = vmatpush1.bf16.msra.mxu0 %v164
    %243 = vmatprep.subr.bf16.mxu0 %v173
    %244 = vmatpush1.bf16.msra.mxu0 %v172
    %245 = vmatprep.subr.bf16.mxu0 0
    %246 = vmatpush1.bf16.msra.mxu0 0
    %247 = vmatprep.subr.bf16.mxu0 0
    %248 = vmatpush1.bf16.msra.mxu0 0
    %249 = vmatprep.subr.bf16.mxu0 0
    %250 = vmatpush1.bf16.msra.mxu0 0
    %251 = vmatprep.subr.bf16.mxu0 0
    %252 = vmatpush1.bf16.msra.mxu0 0
    %253 = vmatprep.subr.bf16.mxu0 0
    %254 = vmatpush1.bf16.msra.mxu0 0
    %255 = vmatprep.subr.bf16.mxu0 0
    %256 = vmatpush1.bf16.msra.mxu0 0
    %257 = vmatprep.subr.bf16.mxu0 0
    %258 = vmatpush1.bf16.msra.mxu0 0
    %259 = vmatprep.subr.bf16.mxu0 0
    %260 = vmatpush1.bf16.msra.mxu0 0
    %261 = vmatprep.subr.bf16.mxu0 0
    %262 = vmatpush1.bf16.msra.mxu0 0
    %263 = vmatprep.subr.bf16.mxu0 0
    %264 = vmatpush1.bf16.msra.mxu0 0
    %265 = vmatprep.subr.bf16.mxu0 0
    %266 = vmatpush1.bf16.msra.mxu0 0
    %267 = vmatprep.subr.bf16.mxu0 0
    %268 = vmatpush1.bf16.msra.mxu0 0
    %269 = vmatprep.subr.bf16.mxu0 0
    %270 = vmatpush1.bf16.msra.mxu0 0
    %271 = vmatprep.subr.bf16.mxu0 0
    %272 = vmatpush1.bf16.msra.mxu0 0
    %273 = vmatprep.mubr.bf16.mxu0 0
    %274 = vmatmul.mubr.bf16.gmra.mrb[0].mxu0 %v196
    %v275 = vpop.f32.mrb[0].mxu0
    %v276 = vadd.f32 %v80, %v275
    %v277 = vpop.f32.mrb[0].mxu0
    %v278 = vadd.f32 %v84, %v277
    %v279 = vpop.f32.mrb[0].mxu0
    %v280 = vadd.f32 %v80, %v279
    %v281 = vpop.f32.mrb[0].mxu0
    %v282 = vadd.f32 %v84, %v281
    %283 = vdwg.mxu0
    %284 = vmatprep.subr.bf16.mxu0 %v167
    %285 = vmatpush1.bf16.msra.mxu0 %v166
    %286 = vmatprep.subr.bf16.mxu0 %v175
    %287 = vmatpush1.bf16.msra.mxu0 %v174
    %288 = vmatprep.subr.bf16.mxu0 0
    %289 = vmatpush1.bf16.msra.mxu0 0
    %290 = vmatprep.subr.bf16.mxu0 0
    %291 = vmatpush1.bf16.msra.mxu0 0
    %292 = vmatprep.subr.bf16.mxu0 0
    %293 = vmatpush1.bf16.msra.mxu0 0
    %294 = vmatprep.subr.bf16.mxu0 0
    %295 = vmatpush1.bf16.msra.mxu0 0
    %296 = vmatprep.subr.bf16.mxu0 0
    %297 = vmatpush1.bf16.msra.mxu0 0
    %298 = vmatprep.subr.bf16.mxu0 0
    %299 = vmatpush1.bf16.msra.mxu0 0
    %300 = vmatprep.subr.bf16.mxu0 0
    %301 = vmatpush1.bf16.msra.mxu0 0
    %302 = vmatprep.subr.bf16.mxu0 0
    %303 = vmatpush1.bf16.msra.mxu0 0
    %304 = vmatprep.subr.bf16.mxu0 0
    %305 = vmatpush1.bf16.msra.mxu0 0
    %306 = vmatprep.subr.bf16.mxu0 0
    %307 = vmatpush1.bf16.msra.mxu0 0
    %308 = vmatprep.subr.bf16.mxu0 0
    %309 = vmatpush1.bf16.msra.mxu0 0
    %310 = vmatprep.subr.bf16.mxu0 0
    %311 = vmatpush1.bf16.msra.mxu0 0
    %312 = vmatprep.subr.bf16.mxu0 0
    %313 = vmatpush1.bf16.msra.mxu0 0
    %314 = vmatprep.subr.bf16.mxu0 0
    %315 = vmatpush1.bf16.msra.mxu0 0
    %316 = vmatprep.mubr.bf16.mxu0 0
    %317 = vmatmul.mubr.bf16.gmra.mrb[0].mxu0 %v196
    %v318 = vpop.f32.mrb[0].mxu0
    %v319 = vadd.f32 %v88, %v318
    %v320 = vpop.f32.mrb[0].mxu0
    %v321 = vadd.f32 %v92, %v320
    %v322 = vpop.f32.mrb[0].mxu0
    %v323 = vadd.f32 %v88, %v322
    %v324 = vpop.f32.mrb[0].mxu0
    %v325 = vadd.f32 %v92, %v324
    %326 = vdwg.mxu0
    %327 = vmatprep.subr.bf16.mxu0 %v169
    %328 = vmatpush1.bf16.msra.mxu0 %v168
    %329 = vmatprep.subr.bf16.mxu0 %v177
    %330 = vmatpush1.bf16.msra.mxu0 %v176
    %331 = vmatprep.subr.bf16.mxu0 0
    %332 = vmatpush1.bf16.msra.mxu0 0
    %333 = vmatprep.subr.bf16.mxu0 0
    %334 = vmatpush1.bf16.msra.mxu0 0
    %335 = vmatprep.subr.bf16.mxu0 0
    %336 = vmatpush1.bf16.msra.mxu0 0
    %337 = vmatprep.subr.bf16.mxu0 0
    %338 = vmatpush1.bf16.msra.mxu0 0
    %339 = vmatprep.subr.bf16.mxu0 0
    %340 = vmatpush1.bf16.msra.mxu0 0
    %341 = vmatprep.subr.bf16.mxu0 0
    %342 = vmatpush1.bf16.msra.mxu0 0
    %343 = vmatprep.subr.bf16.mxu0 0
    %344 = vmatpush1.bf16.msra.mxu0 0
    %345 = vmatprep.subr.bf16.mxu0 0
    %346 = vmatpush1.bf16.msra.mxu0 0
    %347 = vmatprep.subr.bf16.mxu0 0
    %348 = vmatpush1.bf16.msra.mxu0 0
    %349 = vmatprep.subr.bf16.mxu0 0
    %350 = vmatpush1.bf16.msra.mxu0 0
    %351 = vmatprep.subr.bf16.mxu0 0
    %352 = vmatpush1.bf16.msra.mxu0 0
    %353 = vmatprep.subr.bf16.mxu0 0
    %354 = vmatpush1.bf16.msra.mxu0 0
    %355 = vmatprep.subr.bf16.mxu0 0
    %356 = vmatpush1.bf16.msra.mxu0 0
    %357 = vmatprep.subr.bf16.mxu0 0
    %358 = vmatpush1.bf16.msra.mxu0 0
    %359 = vmatprep.mubr.bf16.mxu0 0
    %360 = vmatmul.mubr.bf16.gmra.mrb[0].mxu0 %v196
    %v361 = vpop.f32.mrb[0].mxu0
    %v362 = vadd.f32 %v96, %v361
    %v363 = vpop.f32.mrb[0].mxu0
    %v364 = vadd.f32 %v100, %v363
    %v365 = vpop.f32.mrb[0].mxu0
    %v366 = vadd.f32 %v96, %v365
    %v367 = vpop.f32.mrb[0].mxu0
    %v368 = vadd.f32 %v100, %v367
    %369 = vdwg.mxu0
    %v370 = vmax.f32 %v233, 0.0
    %v371 = vmax.f32 %v235, 0.0
    %v372 = vmax.f32 %v276, 0.0
    %v373 = vmax.f32 %v278, 0.0
    %v374 = vmax.f32 %v319, 0.0
    %v375 = vmax.f32 %v321, 0.0
    %v376 = vmax.f32 %v362, 0.0
    %v377 = vmax.f32 %v364, 0.0
    %v378 = vmax.f32 %v237, 0.0
    %v379 = vmax.f32 %v239, 0.0
    %v380 = vmax.f32 %v280, 0.0
    %v381 = vmax.f32 %v282, 0.0
    %v382 = vmax.f32 %v323, 0.0
    %v383 = vmax.f32 %v325, 0.0
    %v384 = vmax.f32 %v366, 0.0
    %v385 = vmax.f32 %v368, 0.0
    %v386 = vadd.f32 %v370, %v371
    %v387 = vadd.f32 %v378, %v379
    %v388 = vadd.f32 %v386, %v372
    %v389 = vadd.f32 %v387, %v380
    %v390 = vadd.f32 %v388, %v373
    %v391 = vadd.f32 %v389, %v381
    %v392 = vadd.f32 %v390, %v374
    %v393 = vadd.f32 %v391, %v382
    %v394 = vadd.f32 %v392, %v375
    %v395 = vadd.f32 %v393, %v383
    %v396 = vadd.f32 %v394, %v376
    %v397 = vadd.f32 %v395, %v384
    %v398 = vadd.f32 %v396, %v377
    %v399 = vadd.f32 %v397, %v385
    %v400 = vld [vmem:[#allocation4] sm:$0xff]
    %v401 = vld [vmem:[#allocation4 + $0x8] sm:$0xff]
    %v402 = vld [vmem:[#allocation4 + $0x10] sm:$0xff]
    %v403 = vld [vmem:[#allocation4 + $0x18] sm:$0xff]
    %v404 = vld [vmem:[#allocation4 + $0x20] sm:$0xff]
    %v405 = vld [vmem:[#allocation4 + $0x28] sm:$0xff]
    %v406 = vld [vmem:[#allocation4 + $0x30] sm:$0xff]
    %v407 = vld [vmem:[#allocation4 + $0x38] sm:$0xff]
    %v408 = vld [vmem:[#allocation4 + $0x40] sm:$0xff]
    %v409 = vld [vmem:[#allocation4 + $0x48] sm:$0xff]
    %v410 = vld [vmem:[#allocation4 + $0x50] sm:$0xff]
    %v411 = vld [vmem:[#allocation4 + $0x58] sm:$0xff]
    %v412 = vld [vmem:[#allocation4 + $0x60] sm:$0xff]
    %v413 = vld [vmem:[#allocation4 + $0x68] sm:$0xff]
    %v414 = vld [vmem:[#allocation4 + $0x70] sm:$0xff]
    %v415 = vld [vmem:[#allocation4 + $0x78] sm:$0xff]
    %v416 = vld [vmem:[%s4] sm:$0x1]
    %v418 = vlaneseq
    %v419 = vshrl.u32 %v418, 7
    %v420 = vsub.s32 0, %v419
    %v421 = vrot.slane %v416, %v420
    %423 = vmatprep.subr.mxu0 0.0
    %424 = vmatpush1.msra.mxu0 %v400
    %425 = vmatprep.subr.mxu0 0.0
    %426 = vmatpush1.msra.mxu0 %v401
    %427 = vmatprep.subr.mxu0 0.0
    %428 = vmatpush1.msra.mxu0 %v402
    %429 = vmatprep.subr.mxu0 0.0
    %430 = vmatpush1.msra.mxu0 %v403
    %431 = vmatprep.subr.mxu0 0.0
    %432 = vmatpush1.msra.mxu0 %v404
    %433 = vmatprep.subr.mxu0 0.0
    %434 = vmatpush1.msra.mxu0 %v405
    %435 = vmatprep.subr.mxu0 0.0
    %436 = vmatpush1.msra.mxu0 %v406
    %437 = vmatprep.subr.mxu0 0.0
    %438 = vmatpush1.msra.mxu0 %v407
    %439 = vmatprep.subr.mxu0 0.0
    %440 = vmatpush1.msra.mxu0 %v408
    %441 = vmatprep.subr.mxu0 0.0
    %442 = vmatpush1.msra.mxu0 %v409
    %443 = vmatprep.subr.mxu0 0.0
    %444 = vmatpush1.msra.mxu0 %v410
    %445 = vmatprep.subr.mxu0 0.0
    %446 = vmatpush1.msra.mxu0 %v411
    %447 = vmatprep.subr.mxu0 0.0
    %448 = vmatpush1.msra.mxu0 %v412
    %449 = vmatprep.subr.mxu0 0.0
    %450 = vmatpush1.msra.mxu0 %v413
    %451 = vmatprep.subr.mxu0 0.0
    %452 = vmatpush1.msra.mxu0 %v414
    %453 = vmatprep.subr.mxu0 0.0
    %454 = vmatpush1.msra.mxu0 %v415
    %455 = vmatprep.subr.mxu0 0.0
    %456 = vmatpush1.msra.mxu0 0.0
    %457 = vmatprep.subr.mxu0 0.0
    %458 = vmatpush1.msra.mxu0 0.0
    %459 = vmatprep.subr.mxu0 0.0
    %460 = vmatpush1.msra.mxu0 0.0
    %461 = vmatprep.subr.mxu0 0.0
    %462 = vmatpush1.msra.mxu0 0.0
    %463 = vmatprep.subr.mxu0 0.0
    %464 = vmatpush1.msra.mxu0 0.0
    %465 = vmatprep.subr.mxu0 0.0
    %466 = vmatpush1.msra.mxu0 0.0
    %467 = vmatprep.subr.mxu0 0.0
    %468 = vmatpush1.msra.mxu0 0.0
    %469 = vmatprep.subr.mxu0 0.0
    %470 = vmatpush1.msra.mxu0 0.0
    %471 = vmatprep.subr.mxu0 0.0
    %472 = vmatpush1.msra.mxu0 0.0
    %473 = vmatprep.subr.mxu0 0.0
    %474 = vmatpush1.msra.mxu0 0.0
    %475 = vmatprep.subr.mxu0 0.0
    %476 = vmatpush1.msra.mxu0 0.0
    %477 = vmatprep.subr.mxu0 0.0
    %478 = vmatpush1.msra.mxu0 0.0
    %479 = vmatprep.subr.mxu0 0.0
    %480 = vmatpush1.msra.mxu0 0.0
    %481 = vmatprep.subr.mxu0 0.0
    %482 = vmatpush1.msra.mxu0 0.0
    %483 = vmatprep.subr.mxu0 0.0
    %484 = vmatpush1.msra.mxu0 0.0
    %485 = vmatprep.subr.mxu0 0.0
    %486 = vmatpush1.msra.mxu0 0.0
    %487 = vmatprep.mubr.f32.mxu0 0.0
    %488 = vmatmul.mubr.f32.gmra.mrb[0].mxu0 %v398
    %v489 = vpop.f32.mrb[0].mxu0
    %v490 = vadd.f32 %v421, %v489
    %v491 = vpop.f32.mrb[0].mxu0
    %492 = vmatprep.mubr.f32.mxu0 0.0
    %493 = vmatmul.mubr.f32.gmra.mrb[0].mxu0 %v399
    %v494 = vpop.f32.mrb[0].mxu0
    %v495 = vadd.f32 %v421, %v494
    %v496 = vpop.f32.mrb[0].mxu0
    %497 = vdwg.mxu0
    %498 = vmax.xlane.f32.xlu0 %v490
    %v499 = vpop.xlane.xlu0 %498
    %500 = vmax.xlane.f32.xlu0 %v495
    %v501 = vpop.xlane.xlu0 %500
    %v502 = vsub.f32 %v490, %v499
    %v503 = vsub.f32 %v495, %v501
    %v504 = vmul.f32 %v502, 1.442695
    %v505 = vpow.pop %v504
    %v506 = vmul.f32 %v503, 1.442695
    %v507 = vpow.pop %v506
    %508 = vadd.xlane.f32.xlu0 %v505
    %v509 = vpop.xlane.xlu0 %508
    %510 = vadd.xlane.f32.xlu0 %v507
    %v511 = vpop.xlane.xlu0 %510
    %v512 = vrcp.pop %v509
    %v513 = vrcp.pop %v511
    %v514 = vmul.f32 %v505, %v512
    %v515 = vmul.f32 %v507, %v513
    %516 = vst [vmem:[%s5] sm:$0xff] %v514
    %517 = vst [vmem:[%s5 + $0x8] sm:$0xff] %v515
    // Predicated region
    $region30: #{kan_forward.1} parent=1 // pred_check
      _
    $region31: #{kan_forward.1} parent=1 // pred_check_branch
      %519 = sbr.rel (0) target = $region33
    $region32: #{kan_forward.1} parent=1 // pred_region
      _
    $region33: #{kan_forward.1} parent=1 // pred_fallthru
      _
    // Predicated region
    $region34: #{kan_forward.1} parent=1 // pred_check
      _
    $region35: #{kan_forward.1} parent=1 // pred_check_branch
      %521 = sbr.rel (0) target = $region37
    $region36: #{kan_forward.1} parent=1 // pred_region
      _
    $region37: #{kan_forward.1} parent=1 // pred_fallthru
      _
    %522 = vsyncpa [#allocation3], 1
    %523 = vsyncpa [#allocation5], 1

</llo_original>
